<compile_context>
chip_gen: v6e
topology: v6e:2x2x1
jax: 0.10.0
libtpu: 0.0.40
codegen_flags: <defaults>
</compile_context>

<pallas_src>
import functools

import jax
import jax.numpy as jnp
from jax.experimental import pallas as pl
from jax.experimental.pallas import tpu as pltpu


def multivae_kernel(x_ref, wq1_ref, bq1_ref, wq2m_ref, bq2m_ref,
                    wq2v_ref, bq2v_ref, wp1_ref, bp1_ref, wp2_ref, bp2_ref,
                    z_ref, part_ref, *, batch_size):
    tb = x_ref.shape[0]
    x = x_ref[...].astype(jnp.float32)

    # --- encode ---
    # F.normalize(input, p=2, dim=1, eps=1e-12): x / max(||x||, eps)
    #   == x * rsqrt(max(sum(x^2), eps^2)); rsqrt runs on the (otherwise
    #   idle) EUP slot instead of a VALU divide.
    sumsq = jnp.sum(x * x, axis=1, keepdims=True)
    h = x * jax.lax.rsqrt(jnp.maximum(sumsq, 1e-24))
    # dropout: identity (eval mode)

    # bf16 MXU operands, f32 accumulation; elementwise stays f32.
    h = jnp.tanh(
        jnp.dot(h.astype(jnp.bfloat16), wq1_ref[...],
                preferred_element_type=jnp.float32) + bq1_ref[...])
    h16 = h.astype(jnp.bfloat16)
    mu = (jnp.dot(h16, wq2m_ref[...], preferred_element_type=jnp.float32)
          + bq2m_ref[...])
    logvar = (jnp.dot(h16, wq2v_ref[...], preferred_element_type=jnp.float32)
              + bq2v_ref[...])

    # --- reparameterize (eval: z = mu) ---

    # --- decode ---
    hd = jnp.tanh(
        jnp.dot(mu.astype(jnp.bfloat16), wp1_ref[...],
                preferred_element_type=jnp.float32) + bp1_ref[...])
    z_out = (jnp.dot(hd.astype(jnp.bfloat16), wp2_ref[...],
                     preferred_element_type=jnp.float32) + bp2_ref[...])
    z_ref[...] = z_out.astype(z_ref.dtype)

    # --- per-tile partial losses (padded rows masked) ---
    row = (pl.program_id(0) * tb
           + jax.lax.broadcasted_iota(jnp.int32, (tb, 1), 0))
    valid = (row < batch_size).astype(jnp.float32)

    # KL: sum over rows of sum(1 + logvar - mu^2 - exp(logvar), dim=1)
    kl_row = jnp.sum(1.0 + logvar - mu * mu - jnp.exp(logvar),
                     axis=1, keepdims=True)
    kl_part = jnp.sum(kl_row * valid)

    # CE: sum over rows of sum(log_softmax(z, dim=1) * x, dim=1)
    m = jnp.max(z_out, axis=1, keepdims=True)
    shifted = z_out - m
    lse = jnp.log(jnp.sum(jnp.exp(shifted), axis=1, keepdims=True))
    ce_row = jnp.sum((shifted - lse) * x, axis=1, keepdims=True)
    ce_part = jnp.sum(ce_row * valid)

    # Lane-dense (8,128) partials tile: row 0 = kl partial, row 1 = ce partial.
    r = jax.lax.broadcasted_iota(jnp.int32, (8, 128), 0)
    part_ref[0] = jnp.where(r == 0, kl_part,
                            jnp.where(r == 1, ce_part, 0.0))


def multivae_forward(x, params, *, latent_dim, anneal):
    B, N = x.shape
    wq1, bq1, wq2, bq2, wp1, bp1, wp2, bp2 = params
    hid = wq1.shape[1]

    # Split the encoder output layer into mu / logvar halves so the kernel
    # avoids the lane-misaligned slice at lane `latent_dim`.
    wq2m, wq2v = wq2[:, :latent_dim], wq2[:, latent_dim:]
    bq2m, bq2v = bq2[:, :latent_dim], bq2[:, latent_dim:]

    # bf16 weights for the MXU (halves HBM/VMEM traffic); biases stay f32.
    bf16 = jnp.bfloat16
    wq1_b, wq2m_b, wq2v_b, wp1_b, wp2_b = (
        wq1.astype(bf16), wq2m.astype(bf16), wq2v.astype(bf16),
        wp1.astype(bf16), wp2.astype(bf16))

    # Batch tiling: up to 256 rows per grid step (MXU-width rows on v6e/v7x).
    TB = min(256, max(8, ((B + 7) // 8) * 8))
    B_pad = ((B + TB - 1) // TB) * TB
    num_tiles = B_pad // TB
    x_pad = jnp.pad(x, ((0, B_pad - B), (0, 0))) if B_pad != B else x

    resident = lambda shape: pl.BlockSpec(shape, lambda i: (0, 0))

    weights_and_biases = (wq1_b, bq1, wq2m_b, bq2m, wq2v_b, bq2v,
                          wp1_b, bp1, wp2_b, bp2)
    flops = 2 * B_pad * (N * hid + 2 * hid * latent_dim
                         + latent_dim * hid + hid * N)
    transcendentals = B_pad * (2 * hid + latent_dim + 2 * N + 2)
    bytes_accessed = (x_pad.size * 4 + B_pad * N * 4
                      + num_tiles * 8 * 128 * 4
                      + sum(int(a.size) * a.dtype.itemsize
                            for a in weights_and_biases))

    kernel = functools.partial(multivae_kernel, batch_size=B)

    z_pad, partials = pl.pallas_call(
        kernel,
        out_shape=(
            jax.ShapeDtypeStruct((B_pad, N), jnp.float32),
            jax.ShapeDtypeStruct((num_tiles, 8, 128), jnp.float32),
        ),
        grid=(num_tiles,),
        in_specs=[
            pl.BlockSpec((TB, N), lambda i: (i, 0)),        # x tile
            resident(wq1_b.shape), resident(bq1.shape),
            resident(wq2m_b.shape), resident(bq2m.shape),
            resident(wq2v_b.shape), resident(bq2v.shape),
            resident(wp1_b.shape), resident(bp1.shape),
            resident(wp2_b.shape), resident(bp2.shape),
        ],
        out_specs=(
            pl.BlockSpec((TB, N), lambda i: (i, 0)),        # z tile (lane-dense)
            pl.BlockSpec((1, 8, 128), lambda i: (i, 0, 0)),  # loss partials
        ),
        compiler_params=pltpu.CompilerParams(
            dimension_semantics=("parallel",),
            vmem_limit_bytes=64 * 1024 * 1024,
        ),
        cost_estimate=pl.CostEstimate(
            flops=flops,
            transcendentals=transcendentals,
            bytes_accessed=bytes_accessed),
    )(x_pad, *weights_and_biases)

    z = z_pad[:B]
    kl_total = jnp.sum(partials[:, 0, 0])
    ce_total = jnp.sum(partials[:, 1, 0])
    kl_loss = -0.5 * (kl_total / B) * anneal
    ce_loss = -(ce_total / B)
    return z, kl_loss + ce_loss


def init_linear(key, d_in, d_out):
    """Matches MultiVAE.init_weights: W ~ N(0, sqrt(2/(fan_in+fan_out))),
    b ~ N(0, 0.001). Returned W is (d_in, d_out) = transpose of torch layout."""
    kw, kb = jax.random.split(key)
    std = (2.0 / (d_in + d_out)) ** 0.5
    w = jax.random.normal(kw, (d_in, d_out), jnp.float32) * std
    b = jax.random.normal(kb, (1, d_out), jnp.float32) * 0.001
    return w, b


if __name__ == "__main__":
    # config: p_dims = [latent, hidden, n_items]
    p_dims = [64, 128, 256]
    q_dims = p_dims[::-1]                          # [256, 128, 64]
    temp_q_dims = q_dims[:-1] + [q_dims[-1] * 2]   # [256, 128, 128]
    anneal_cap = 0.2
    total_anneal_steps = 200000
    update = 1  # after one forward call
    anneal = min(anneal_cap, 1.0 * update / total_anneal_steps)

    B = 8
    N = p_dims[-1]
    latent = q_dims[-1]

    key = jax.random.PRNGKey(0)
    k_x, kq1, kq2, kp1, kp2 = jax.random.split(key, 5)

    # deterministic "implicit feedback"-like input (non-negative)
    x = (jax.random.uniform(k_x, (B, N), jnp.float32) > 0.8).astype(jnp.float32)

    # q_layers: 256->128, 128->128 ; p_layers: 64->128, 128->256
    wq1, bq1 = init_linear(kq1, temp_q_dims[0], temp_q_dims[1])
    wq2, bq2 = init_linear(kq2, temp_q_dims[1], temp_q_dims[2])
    wp1, bp1 = init_linear(kp1, p_dims[0], p_dims[1])
    wp2, bp2 = init_linear(kp2, p_dims[1], p_dims[2])
    params = (wq1, bq1, wq2, bq2, wp1, bp1, wp2, bp2)

    z, loss = multivae_forward(x, params, latent_dim=latent, anneal=anneal)
    jax.block_until_ready((z, loss))

    # sanity check against a pure-JAX reference (same bf16 MXU / f32-acc math)
    def ref_forward(x):
        bf = jnp.bfloat16
        wq2m, wq2v = wq2[:, :latent], wq2[:, latent:]
        bq2m, bq2v = bq2[:, :latent], bq2[:, latent:]
        sumsq = jnp.sum(x * x, axis=1, keepdims=True)
        h = x * jax.lax.rsqrt(jnp.maximum(sumsq, 1e-24))
        h = jnp.tanh(jnp.dot(h.astype(bf), wq1.astype(bf),
                             preferred_element_type=jnp.float32) + bq1)
        mu = jnp.dot(h.astype(bf), wq2m.astype(bf),
                     preferred_element_type=jnp.float32) + bq2m
        logvar = jnp.dot(h.astype(bf), wq2v.astype(bf),
                         preferred_element_type=jnp.float32) + bq2v
        hd = jnp.tanh(jnp.dot(mu.astype(bf), wp1.astype(bf),
                              preferred_element_type=jnp.float32) + bp1)
        zz = jnp.dot(hd.astype(bf), wp2.astype(bf),
                     preferred_element_type=jnp.float32) + bp2
        kl = -0.5 * jnp.mean(
            jnp.sum(1 + logvar - mu ** 2 - jnp.exp(logvar), axis=1)) * anneal
        ce = -jnp.mean(jnp.sum(jax.nn.log_softmax(zz, axis=1) * x, axis=1))
        return zz, kl + ce

    z_ref, loss_ref = ref_forward(x)
    assert jnp.allclose(z, z_ref, atol=2e-3, rtol=2e-3)
    assert jnp.allclose(loss, loss_ref, atol=2e-3, rtol=2e-3)

    print("KERNEL_OK")
</pallas_src>

<mosaic_0001>
module attributes {stable_mosaic.version = 11 : i64} {
  func.func @multivae_kernel(%arg0: i32, %arg1: memref<8x256xf32, #tpu.memory_space<vmem>>, %arg2: memref<256x128xbf16, #tpu.memory_space<vmem>>, %arg3: memref<1x128xf32, #tpu.memory_space<vmem>>, %arg4: memref<128x64xbf16, #tpu.memory_space<vmem>>, %arg5: memref<1x64xf32, #tpu.memory_space<vmem>>, %arg6: memref<128x64xbf16, #tpu.memory_space<vmem>>, %arg7: memref<1x64xf32, #tpu.memory_space<vmem>>, %arg8: memref<64x128xbf16, #tpu.memory_space<vmem>>, %arg9: memref<1x128xf32, #tpu.memory_space<vmem>>, %arg10: memref<128x256xbf16, #tpu.memory_space<vmem>>, %arg11: memref<1x256xf32, #tpu.memory_space<vmem>>, %arg12: memref<8x256xf32, #tpu.memory_space<vmem>>, %arg13: memref<1x8x128xf32, #tpu.memory_space<vmem>>) attributes {dimension_semantics = [#tpu.dimension_semantics<parallel>], iteration_bounds = array<i64: 1>, scalar_prefetch = 0 : i64, scratch_operands = 0 : i64, tpu.core_type = #tpu.core_type<tc>, window_params = [{transform_indices = @transform_0, window_bounds = array<i64: 8, 256>}, {pipeline_mode = #tpu.pipeline_mode<synchronous>, transform_indices = @transform_1, window_bounds = array<i64: 256, 128>}, {pipeline_mode = #tpu.pipeline_mode<synchronous>, transform_indices = @transform_2, window_bounds = array<i64: 1, 128>}, {pipeline_mode = #tpu.pipeline_mode<synchronous>, transform_indices = @transform_3, window_bounds = array<i64: 128, 64>}, {pipeline_mode = #tpu.pipeline_mode<synchronous>, transform_indices = @transform_4, window_bounds = array<i64: 1, 64>}, {pipeline_mode = #tpu.pipeline_mode<synchronous>, transform_indices = @transform_5, window_bounds = array<i64: 128, 64>}, {pipeline_mode = #tpu.pipeline_mode<synchronous>, transform_indices = @transform_6, window_bounds = array<i64: 1, 64>}, {pipeline_mode = #tpu.pipeline_mode<synchronous>, transform_indices = @transform_7, window_bounds = array<i64: 64, 128>}, {pipeline_mode = #tpu.pipeline_mode<synchronous>, transform_indices = @transform_8, window_bounds = array<i64: 1, 128>}, {pipeline_mode = #tpu.pipeline_mode<synchronous>, transform_indices = @transform_9, window_bounds = array<i64: 128, 256>}, {pipeline_mode = #tpu.pipeline_mode<synchronous>, transform_indices = @transform_10, window_bounds = array<i64: 1, 256>}, {transform_indices = @transform_11, window_bounds = array<i64: 8, 256>}, {transform_indices = @transform_12, window_bounds = array<i64: 1, 8, 128>}]} {
    %c0 = arith.constant 0 : index
    %c0_0 = arith.constant 0 : index
    %0 = vector.load %arg1[%c0, %c0_0] : memref<8x256xf32, #tpu.memory_space<vmem>>, vector<8x256xf32>
    %1 = arith.mulf %0, %0 : vector<8x256xf32>
    %cst = arith.constant dense<0.000000e+00> : vector<8xf32>
    %2 = vector.multi_reduction <add>, %1, %cst [1] : vector<8x256xf32> to vector<8xf32>
    %3 = vector.shape_cast %2 : vector<8xf32> to vector<8x1xf32>
    %cst_1 = arith.constant 1.000000e-24 : f32
    %4 = vector.broadcast %cst_1 : f32 to vector<8x1xf32>
    %5 = arith.maximumf %3, %4 : vector<8x1xf32>
    %6 = math.rsqrt %5 : vector<8x1xf32>
    %7 = vector.broadcast %6 : vector<8x1xf32> to vector<8x256xf32>
    %8 = arith.mulf %0, %7 : vector<8x256xf32>
    %9 = arith.truncf %8 : vector<8x256xf32> to vector<8x256xbf16>
    %c0_2 = arith.constant 0 : index
    %c0_3 = arith.constant 0 : index
    %10 = vector.load %arg2[%c0_2, %c0_3] : memref<256x128xbf16, #tpu.memory_space<vmem>>, vector<256x128xbf16>
    %cst_4 = arith.constant dense<0.000000e+00> : vector<8x128xf32>
    %11 = tpu.matmul %9, %10, %cst_4 {dimension_numbers = #tpu.dot_dimension_numbers<[1], [0], [0], [1], [0, 0, 1, 1], [], []>} : vector<8x256xbf16>, vector<256x128xbf16>, vector<8x128xf32> -> vector<8x128xf32>
    %c0_5 = arith.constant 0 : index
    %c0_6 = arith.constant 0 : index
    %12 = vector.load %arg3[%c0_5, %c0_6] : memref<1x128xf32, #tpu.memory_space<vmem>>, vector<1x128xf32>
    %13 = vector.broadcast %12 : vector<1x128xf32> to vector<8x128xf32>
    %14 = arith.addf %11, %13 : vector<8x128xf32>
    %15 = math.tanh %14 : vector<8x128xf32>
    %16 = arith.truncf %15 : vector<8x128xf32> to vector<8x128xbf16>
    %c0_7 = arith.constant 0 : index
    %c0_8 = arith.constant 0 : index
    %17 = vector.load %arg4[%c0_7, %c0_8] : memref<128x64xbf16, #tpu.memory_space<vmem>>, vector<128x64xbf16>
    %cst_9 = arith.constant dense<0.000000e+00> : vector<8x64xf32>
    %18 = tpu.matmul %16, %17, %cst_9 {dimension_numbers = #tpu.dot_dimension_numbers<[1], [0], [0], [1], [0, 0, 1, 1], [], []>} : vector<8x128xbf16>, vector<128x64xbf16>, vector<8x64xf32> -> vector<8x64xf32>
    %c0_10 = arith.constant 0 : index
    %c0_11 = arith.constant 0 : index
    %19 = vector.load %arg5[%c0_10, %c0_11] : memref<1x64xf32, #tpu.memory_space<vmem>>, vector<1x64xf32>
    %20 = vector.broadcast %19 : vector<1x64xf32> to vector<8x64xf32>
    %21 = arith.addf %18, %20 : vector<8x64xf32>
    %c0_12 = arith.constant 0 : index
    %c0_13 = arith.constant 0 : index
    %22 = vector.load %arg6[%c0_12, %c0_13] : memref<128x64xbf16, #tpu.memory_space<vmem>>, vector<128x64xbf16>
    %cst_14 = arith.constant dense<0.000000e+00> : vector<8x64xf32>
    %23 = tpu.matmul %16, %22, %cst_14 {dimension_numbers = #tpu.dot_dimension_numbers<[1], [0], [0], [1], [0, 0, 1, 1], [], []>} : vector<8x128xbf16>, vector<128x64xbf16>, vector<8x64xf32> -> vector<8x64xf32>
    %c0_15 = arith.constant 0 : index
    %c0_16 = arith.constant 0 : index
    %24 = vector.load %arg7[%c0_15, %c0_16] : memref<1x64xf32, #tpu.memory_space<vmem>>, vector<1x64xf32>
    %25 = vector.broadcast %24 : vector<1x64xf32> to vector<8x64xf32>
    %26 = arith.addf %23, %25 : vector<8x64xf32>
    %27 = arith.truncf %21 : vector<8x64xf32> to vector<8x64xbf16>
    %c0_17 = arith.constant 0 : index
    %c0_18 = arith.constant 0 : index
    %28 = vector.load %arg8[%c0_17, %c0_18] : memref<64x128xbf16, #tpu.memory_space<vmem>>, vector<64x128xbf16>
    %cst_19 = arith.constant dense<0.000000e+00> : vector<8x128xf32>
    %29 = tpu.matmul %27, %28, %cst_19 {dimension_numbers = #tpu.dot_dimension_numbers<[1], [0], [0], [1], [0, 0, 1, 1], [], []>} : vector<8x64xbf16>, vector<64x128xbf16>, vector<8x128xf32> -> vector<8x128xf32>
    %c0_20 = arith.constant 0 : index
    %c0_21 = arith.constant 0 : index
    %30 = vector.load %arg9[%c0_20, %c0_21] : memref<1x128xf32, #tpu.memory_space<vmem>>, vector<1x128xf32>
    %31 = vector.broadcast %30 : vector<1x128xf32> to vector<8x128xf32>
    %32 = arith.addf %29, %31 : vector<8x128xf32>
    %33 = math.tanh %32 : vector<8x128xf32>
    %34 = arith.truncf %33 : vector<8x128xf32> to vector<8x128xbf16>
    %c0_22 = arith.constant 0 : index
    %c0_23 = arith.constant 0 : index
    %35 = vector.load %arg10[%c0_22, %c0_23] : memref<128x256xbf16, #tpu.memory_space<vmem>>, vector<128x256xbf16>
    %cst_24 = arith.constant dense<0.000000e+00> : vector<8x256xf32>
    %36 = tpu.matmul %34, %35, %cst_24 {dimension_numbers = #tpu.dot_dimension_numbers<[1], [0], [0], [1], [0, 0, 1, 1], [], []>} : vector<8x128xbf16>, vector<128x256xbf16>, vector<8x256xf32> -> vector<8x256xf32>
    %c0_25 = arith.constant 0 : index
    %c0_26 = arith.constant 0 : index
    %37 = vector.load %arg11[%c0_25, %c0_26] : memref<1x256xf32, #tpu.memory_space<vmem>>, vector<1x256xf32>
    %38 = vector.broadcast %37 : vector<1x256xf32> to vector<8x256xf32>
    %39 = arith.addf %36, %38 : vector<8x256xf32>
    %c0_27 = arith.constant 0 : index
    %c0_28 = arith.constant 0 : index
    %40 = vector.load %arg12[%c0_27, %c0_28] : memref<8x256xf32, #tpu.memory_space<vmem>>, vector<8x256xf32>
    tpu.vector_store %arg12[%c0_27, %c0_28], %39 {strides = array<i32>} : memref<8x256xf32, #tpu.memory_space<vmem>>, vector<8x256xf32>,
    %c8_i32 = arith.constant 8 : i32
    %41 = arith.muli %arg0, %c8_i32 : i32
    %42 = tpu.iota {dimensions = array<i32: 0>} : vector<8x1xi32>
    %43 = vector.broadcast %41 : i32 to vector<8x1xi32>
    %44 = arith.addi %43, %42 : vector<8x1xi32>
    %c8_i32_29 = arith.constant 8 : i32
    %45 = vector.broadcast %c8_i32_29 : i32 to vector<8x1xi32>
    %46 = arith.cmpi slt, %44, %45 : vector<8x1xi32>
    %47 = arith.extui %46 : vector<8x1xi1> to vector<8x1xi32>
    %48 = arith.sitofp %47 : vector<8x1xi32> to vector<8x1xf32>
    %cst_30 = arith.constant 1.000000e+00 : f32
    %49 = vector.broadcast %cst_30 : f32 to vector<8x64xf32>
    %50 = arith.addf %49, %26 : vector<8x64xf32>
    %51 = arith.mulf %21, %21 : vector<8x64xf32>
    %52 = arith.subf %50, %51 : vector<8x64xf32>
    %53 = math.exp %26 : vector<8x64xf32>
    %54 = arith.subf %52, %53 : vector<8x64xf32>
    %cst_31 = arith.constant dense<0.000000e+00> : vector<8xf32>
    %55 = vector.multi_reduction <add>, %54, %cst_31 [1] : vector<8x64xf32> to vector<8xf32>
    %56 = vector.shape_cast %55 : vector<8xf32> to vector<8x1xf32>
    %57 = arith.mulf %56, %48 : vector<8x1xf32>
    %58 = vector.shape_cast %57 : vector<8x1xf32> to vector<1x8x1xf32>
    %cst_32 = arith.constant dense<0.000000e+00> : vector<1xf32>
    %59 = vector.multi_reduction <add>, %58, %cst_32 [1, 2] : vector<1x8x1xf32> to vector<1xf32>
    %60 = vector.shape_cast %59 : vector<1xf32> to vector<1x1x1xf32>
    %61 = vector.extract %60[0, 0, 0] : f32 from vector<1x1x1xf32>
    %cst_33 = arith.constant dense<0xFF800000> : vector<8xf32>
    %62 = vector.multi_reduction <maximumf>, %39, %cst_33 [1] : vector<8x256xf32> to vector<8xf32>
    %63 = vector.shape_cast %62 : vector<8xf32> to vector<8x1xf32>
    %64 = vector.broadcast %63 : vector<8x1xf32> to vector<8x256xf32>
    %65 = arith.subf %39, %64 : vector<8x256xf32>
    %66 = math.exp %65 : vector<8x256xf32>
    %cst_34 = arith.constant dense<0.000000e+00> : vector<8xf32>
    %67 = vector.multi_reduction <add>, %66, %cst_34 [1] : vector<8x256xf32> to vector<8xf32>
    %68 = vector.shape_cast %67 : vector<8xf32> to vector<8x1xf32>
    %69 = math.log %68 : vector<8x1xf32>
    %70 = vector.broadcast %69 : vector<8x1xf32> to vector<8x256xf32>
    %71 = arith.subf %65, %70 : vector<8x256xf32>
    %72 = arith.mulf %71, %0 : vector<8x256xf32>
    %cst_35 = arith.constant dense<0.000000e+00> : vector<8xf32>
    %73 = vector.multi_reduction <add>, %72, %cst_35 [1] : vector<8x256xf32> to vector<8xf32>
    %74 = vector.shape_cast %73 : vector<8xf32> to vector<8x1xf32>
    %75 = arith.mulf %74, %48 : vector<8x1xf32>
    %76 = vector.shape_cast %75 : vector<8x1xf32> to vector<1x8x1xf32>
    %cst_36 = arith.constant dense<0.000000e+00> : vector<1xf32>
    %77 = vector.multi_reduction <add>, %76, %cst_36 [1, 2] : vector<1x8x1xf32> to vector<1xf32>
    %78 = vector.shape_cast %77 : vector<1xf32> to vector<1x1x1xf32>
    %79 = vector.extract %78[0, 0, 0] : f32 from vector<1x1x1xf32>
    %80 = tpu.iota {dimensions = array<i32: 0>} : vector<8x128xi32>
    %c0_i32 = arith.constant 0 : i32
    %81 = vector.broadcast %c0_i32 : i32 to vector<8x128xi32>
    %82 = arith.cmpi eq, %80, %81 : vector<8x128xi32>
    %c1_i32 = arith.constant 1 : i32
    %83 = vector.broadcast %c1_i32 : i32 to vector<8x128xi32>
    %84 = arith.cmpi eq, %80, %83 : vector<8x128xi32>
    %cst_37 = arith.constant 0.000000e+00 : f32
    %85 = vector.broadcast %79 : f32 to vector<8x128xf32>
    %86 = vector.broadcast %cst_37 : f32 to vector<8x128xf32>
    %87 = arith.select %84, %85, %86 : vector<8x128xi1>, vector<8x128xf32>
    %88 = vector.broadcast %61 : f32 to vector<8x128xf32>
    %89 = arith.select %82, %88, %87 : vector<8x128xi1>, vector<8x128xf32>
    %c0_38 = arith.constant 0 : index
    %c0_39 = arith.constant 0 : index
    %c0_40 = arith.constant 0 : index
    %90 = vector.load %arg13[%c0_38, %c0_39, %c0_40] : memref<1x8x128xf32, #tpu.memory_space<vmem>>, vector<1x8x128xf32>
    %91 = vector.shape_cast %90 : vector<1x8x128xf32> to vector<8x128xf32>
    %92 = vector.shape_cast %89 : vector<8x128xf32> to vector<1x8x128xf32>
    tpu.vector_store %arg13[%c0_38, %c0_39, %c0_40], %92 {strides = array<i32>} : memref<1x8x128xf32, #tpu.memory_space<vmem>>, vector<1x8x128xf32>,
    return
  }
  func.func @transform_0(%arg0: i32) -> (i32, i32) {
    %c0_i32 = arith.constant 0 : i32
    %c0_i32_0 = arith.constant 0 : i32
    return %arg0, %c0_i32 : i32, i32
  }
  func.func @transform_1(%arg0: i32) -> (i32, i32) {
    %c0_i32 = arith.constant 0 : i32
    %c0_i32_0 = arith.constant 0 : i32
    %c0_i32_1 = arith.constant 0 : i32
    return %c0_i32, %c0_i32_0 : i32, i32
  }
  func.func @transform_2(%arg0: i32) -> (i32, i32) {
    %c0_i32 = arith.constant 0 : i32
    %c0_i32_0 = arith.constant 0 : i32
    %c0_i32_1 = arith.constant 0 : i32
    return %c0_i32, %c0_i32_0 : i32, i32
  }
  func.func @transform_3(%arg0: i32) -> (i32, i32) {
    %c0_i32 = arith.constant 0 : i32
    %c0_i32_0 = arith.constant 0 : i32
    %c0_i32_1 = arith.constant 0 : i32
    return %c0_i32, %c0_i32_0 : i32, i32
  }
  func.func @transform_4(%arg0: i32) -> (i32, i32) {
    %c0_i32 = arith.constant 0 : i32
    %c0_i32_0 = arith.constant 0 : i32
    %c0_i32_1 = arith.constant 0 : i32
    return %c0_i32, %c0_i32_0 : i32, i32
  }
  func.func @transform_5(%arg0: i32) -> (i32, i32) {
    %c0_i32 = arith.constant 0 : i32
    %c0_i32_0 = arith.constant 0 : i32
    %c0_i32_1 = arith.constant 0 : i32
    return %c0_i32, %c0_i32_0 : i32, i32
  }
  func.func @transform_6(%arg0: i32) -> (i32, i32) {
    %c0_i32 = arith.constant 0 : i32
    %c0_i32_0 = arith.constant 0 : i32
    %c0_i32_1 = arith.constant 0 : i32
    return %c0_i32, %c0_i32_0 : i32, i32
  }
  func.func @transform_7(%arg0: i32) -> (i32, i32) {
    %c0_i32 = arith.constant 0 : i32
    %c0_i32_0 = arith.constant 0 : i32
    %c0_i32_1 = arith.constant 0 : i32
    return %c0_i32, %c0_i32_0 : i32, i32
  }
  func.func @transform_8(%arg0: i32) -> (i32, i32) {
    %c0_i32 = arith.constant 0 : i32
    %c0_i32_0 = arith.constant 0 : i32
    %c0_i32_1 = arith.constant 0 : i32
    return %c0_i32, %c0_i32_0 : i32, i32
  }
  func.func @transform_9(%arg0: i32) -> (i32, i32) {
    %c0_i32 = arith.constant 0 : i32
    %c0_i32_0 = arith.constant 0 : i32
    %c0_i32_1 = arith.constant 0 : i32
    return %c0_i32, %c0_i32_0 : i32, i32
  }
  func.func @transform_10(%arg0: i32) -> (i32, i32) {
    %c0_i32 = arith.constant 0 : i32
    %c0_i32_0 = arith.constant 0 : i32
    %c0_i32_1 = arith.constant 0 : i32
    return %c0_i32, %c0_i32_0 : i32, i32
  }
  func.func @transform_11(%arg0: i32) -> (i32, i32) {
    %c0_i32 = arith.constant 0 : i32
    %c0_i32_0 = arith.constant 0 : i32
    return %arg0, %c0_i32 : i32, i32
  }
  func.func @transform_12(%arg0: i32) -> (i32, i32, i32) {
    %c0_i32 = arith.constant 0 : i32
    %c0_i32_0 = arith.constant 0 : i32
    %c0_i32_1 = arith.constant 0 : i32
    return %arg0, %c0_i32, %c0_i32_0 : i32, i32, i32
  }
}

</mosaic_0001>

<llo_original>
// kernel: tpu_custom_call.1
$region0: #{tpu_custom_call.1}
  #allocation0 [shape = 'u32[]', space=smem, size = 0x4, offset = 0x4, fixed_abs, tag = 'smem constant byte address 0x4 - core index']
  #allocation1 [shape = 'u32[144,128]{1,0:T(1,128)}', space=vmem, size = 0x12000, scoped, tag = 'internal scratch']
  %s0 = inlined_call_operand.hbm [shape: f32[8,256], index: 0, kind: input, shape index: {}]
  %s1 = inlined_call_operand.vmem [shape: bf16[256,128], index: 1, kind: input, shape index: {}]
  %s2 = inlined_call_operand.vmem [shape: f32[1,128], index: 2, kind: input, shape index: {}]
  %s3 = inlined_call_operand.vmem [shape: bf16[128,64], index: 3, kind: input, shape index: {}]
  %s4 = inlined_call_operand.vmem [shape: f32[1,64], index: 4, kind: input, shape index: {}]
  %s5 = inlined_call_operand.vmem [shape: bf16[128,64], index: 5, kind: input, shape index: {}]
  %s6 = inlined_call_operand.vmem [shape: f32[1,64], index: 6, kind: input, shape index: {}]
  %s7 = inlined_call_operand.vmem [shape: bf16[64,128], index: 7, kind: input, shape index: {}]
  %s8 = inlined_call_operand.vmem [shape: f32[1,128], index: 8, kind: input, shape index: {}]
  %s9 = inlined_call_operand.hbm [shape: bf16[128,256], index: 9, kind: input, shape index: {}]
  %s10 = inlined_call_operand.vmem [shape: f32[1,256], index: 10, kind: input, shape index: {}]
  %s11 = inlined_call_operand.hbm [shape: f32[8,256], index: 11, kind: output, shape index: {0}]
  %s12 = inlined_call_operand.hbm [shape: f32[1,8,128], index: 12, kind: output, shape index: {1}]
  %13 = xla_tuple %s11, %s12
  %s14 = sld [smem:[#allocation0]]
  $region70: #{tpu_custom_call.1} parent=0
    _
  %s16 = ssub.s32 1, %s14
  %s17 = scalar_select 0, %s16, %s14
  $region1: #{tpu_custom_call.1} parent=0
    #allocation2 [shape = 'u8[8192]{0}', space=vmem, size = 0x2000, scoped, tag = 'input window, operand 0, single buffered']
    #allocation3 [shape = 's32[1]{0}', space=sflag, size = 0x4, scoped, tag = 'scoped memory for tpu_custom_call.1']
    #allocation4 [shape = 's32[1]{0}', space=sflag, size = 0x4, scoped, tag = 'scoped memory for tpu_custom_call.1']
    #allocation5 [shape = 'u8[65536]{0}', space=vmem, size = 0x10000, scoped, tag = 'input window, operand 9, single buffered']
    #allocation6 [shape = 's32[1]{0}', space=sflag, size = 0x4, scoped, tag = 'scoped memory for tpu_custom_call.1']
    #allocation7 [shape = 'u8[8192]{0}', space=vmem, size = 0x2000, scoped, tag = 'output window, operand 0, single buffered']
    #allocation8 [shape = 'u8[4096]{0}', space=vmem, size = 0x1000, scoped, tag = 'output window, operand 1, single buffered']
    #allocation9 [shape = 's32[1]{0}', space=sflag, size = 0x4, scoped, tag = 'scoped memory for tpu_custom_call.1']
    %18 = vsyncpa [#allocation3], 0
    %19 = vsyncpa [#allocation6], 0
    %20 = vsyncpa [#allocation4], 0
    %21 = vsyncpa [#allocation9], 0
    // Predicated region
    $region2: #{tpu_custom_call.1} parent=1 // pred_check
      _
    $region3: #{tpu_custom_call.1} parent=1 // pred_check_branch
      %23 = sbr.rel (0) target = $region5
    $region4: #{tpu_custom_call.1} parent=1 // pred_region
      %s25 = ssub.s32 256, 256
      %26 = vsyncadd [#allocation3], %s25
      %s28 = sshll.u32 [#allocation2], 4
      %s29 = int_to_ptr.vmem [resolvable:$true] %s28
      %31 = dma.hbm_to_vmem [thread:$0]  %s0, 256, %s29, [#allocation3]
    $region5: #{tpu_custom_call.1} parent=1 // pred_fallthru
      _
    // Predicated region
    $region6: #{tpu_custom_call.1} parent=1 // pred_check
      _
    $region7: #{tpu_custom_call.1} parent=1 // pred_check_branch
      %33 = sbr.rel (0) target = $region9
    $region8: #{tpu_custom_call.1} parent=1 // pred_region
      _
    $region9: #{tpu_custom_call.1} parent=1 // pred_fallthru
      _
    // Predicated region
    $region10: #{tpu_custom_call.1} parent=1 // pred_check
      _
    $region11: #{tpu_custom_call.1} parent=1 // pred_check_branch
      %35 = sbr.rel (0) target = $region13
    $region12: #{tpu_custom_call.1} parent=1 // pred_region
      _
    $region13: #{tpu_custom_call.1} parent=1 // pred_fallthru
      _
    // Predicated region
    $region14: #{tpu_custom_call.1} parent=1 // pred_check
      _
    $region15: #{tpu_custom_call.1} parent=1 // pred_check_branch
      %37 = sbr.rel (0) target = $region17
    $region16: #{tpu_custom_call.1} parent=1 // pred_region
      _
    $region17: #{tpu_custom_call.1} parent=1 // pred_fallthru
      _
    // Predicated region
    $region18: #{tpu_custom_call.1} parent=1 // pred_check
      _
    $region19: #{tpu_custom_call.1} parent=1 // pred_check_branch
      %39 = sbr.rel (0) target = $region21
    $region20: #{tpu_custom_call.1} parent=1 // pred_region
      _
    $region21: #{tpu_custom_call.1} parent=1 // pred_fallthru
      _
    // Predicated region
    $region22: #{tpu_custom_call.1} parent=1 // pred_check
      _
    $region23: #{tpu_custom_call.1} parent=1 // pred_check_branch
      %41 = sbr.rel (0) target = $region25
    $region24: #{tpu_custom_call.1} parent=1 // pred_region
      _
    $region25: #{tpu_custom_call.1} parent=1 // pred_fallthru
      _
    // Predicated region
    $region26: #{tpu_custom_call.1} parent=1 // pred_check
      _
    $region27: #{tpu_custom_call.1} parent=1 // pred_check_branch
      %43 = sbr.rel (0) target = $region29
    $region28: #{tpu_custom_call.1} parent=1 // pred_region
      _
    $region29: #{tpu_custom_call.1} parent=1 // pred_fallthru
      _
    // Predicated region
    $region30: #{tpu_custom_call.1} parent=1 // pred_check
      _
    $region31: #{tpu_custom_call.1} parent=1 // pred_check_branch
      %45 = sbr.rel (0) target = $region33
    $region32: #{tpu_custom_call.1} parent=1 // pred_region
      _
    $region33: #{tpu_custom_call.1} parent=1 // pred_fallthru
      _
    // Predicated region
    $region34: #{tpu_custom_call.1} parent=1 // pred_check
      _
    $region35: #{tpu_custom_call.1} parent=1 // pred_check_branch
      %47 = sbr.rel (0) target = $region37
    $region36: #{tpu_custom_call.1} parent=1 // pred_region
      _
    $region37: #{tpu_custom_call.1} parent=1 // pred_fallthru
      _
    // Predicated region
    $region38: #{tpu_custom_call.1} parent=1 // pred_check
      _
    $region39: #{tpu_custom_call.1} parent=1 // pred_check_branch
      %49 = sbr.rel (0) target = $region41
    $region40: #{tpu_custom_call.1} parent=1 // pred_region
      %s51 = ssub.s32 2048, 2048
      %52 = vsyncadd [#allocation6], %s51
      %s53 = sshll.u32 [#allocation5], 4
      %s54 = int_to_ptr.vmem [resolvable:$true] %s53
      %59 = dma.hbm_to_vmem [thread:$0]  %s9, 2048, %s54, [#allocation6], 128, 128, 8
    $region41: #{tpu_custom_call.1} parent=1 // pred_fallthru
      _
    // Predicated region
    $region42: #{tpu_custom_call.1} parent=1 // pred_check
      _
    $region43: #{tpu_custom_call.1} parent=1 // pred_check_branch
      %61 = sbr.rel (0) target = $region45
    $region44: #{tpu_custom_call.1} parent=1 // pred_region
      _
    $region45: #{tpu_custom_call.1} parent=1 // pred_fallthru
      _
    // Predicated region
    $region46: #{tpu_custom_call.1} parent=1 // pred_check
      _
    $region47: #{tpu_custom_call.1} parent=1 // pred_check_branch
      %63 = sbr.rel (0) target = $region49
    $region48: #{tpu_custom_call.1} parent=1 // pred_region
      %64 = dma.done [#allocation3], 256
    $region49: #{tpu_custom_call.1} parent=1 // pred_fallthru
      _
    // Predicated region
    $region50: #{tpu_custom_call.1} parent=1 // pred_check
      _
    $region51: #{tpu_custom_call.1} parent=1 // pred_check_branch
      %66 = sbr.rel (0) target = $region53
    $region52: #{tpu_custom_call.1} parent=1 // pred_region
      %67 = dma.done [#allocation6], 2048
    $region53: #{tpu_custom_call.1} parent=1 // pred_fallthru
      _
    %v69 = vld [vmem:[#allocation2] sm:$0xff]
    %v70 = vld [vmem:[#allocation2 + $0x8] sm:$0xff]
    %v71 = vmul.f32 %v69, %v69
    %v72 = vmul.f32 %v70, %v70
    %v73 = vadd.f32 %v71, %v72
    %74 = vadd.xlane.f32.xlu0 %v73
    %v75 = vpop.xlane.xlu0 %74
    %v76 = vmax.f32 %v75, 1e-24
    %v77 = vrsqrt.pop %v76
    %v78 = vmul.f32 %v69, %v77
    %v79 = vmul.f32 %v70, %v77
    %v80 = vpack.c.bf16 %v78, %v78
    %v81 = vpack.c.bf16 %v79, %v79
    %v82 = vld [vmem:[%s1] sm:$0xf]
    %v83 = vld [vmem:[%s1 + $0x4] sm:$0xf]
    %v84 = vld [vmem:[%s1 + $0x8] sm:$0xf]
    %v85 = vld [vmem:[%s1 + $0xc] sm:$0xf]
    %v86 = vld [vmem:[%s1 + $0x10] sm:$0xf]
    %v87 = vld [vmem:[%s1 + $0x14] sm:$0xf]
    %v88 = vld [vmem:[%s1 + $0x18] sm:$0xf]
    %v89 = vld [vmem:[%s1 + $0x1c] sm:$0xf]
    %v90 = vld [vmem:[%s1 + $0x20] sm:$0xf]
    %v91 = vld [vmem:[%s1 + $0x24] sm:$0xf]
    %v92 = vld [vmem:[%s1 + $0x28] sm:$0xf]
    %v93 = vld [vmem:[%s1 + $0x2c] sm:$0xf]
    %v94 = vld [vmem:[%s1 + $0x30] sm:$0xf]
    %v95 = vld [vmem:[%s1 + $0x34] sm:$0xf]
    %v96 = vld [vmem:[%s1 + $0x38] sm:$0xf]
    %v97 = vld [vmem:[%s1 + $0x3c] sm:$0xf]
    %v98 = vld [vmem:[%s1 + $0x40] sm:$0xf]
    %v99 = vld [vmem:[%s1 + $0x44] sm:$0xf]
    %v100 = vld [vmem:[%s1 + $0x48] sm:$0xf]
    %v101 = vld [vmem:[%s1 + $0x4c] sm:$0xf]
    %v102 = vld [vmem:[%s1 + $0x50] sm:$0xf]
    %v103 = vld [vmem:[%s1 + $0x54] sm:$0xf]
    %v104 = vld [vmem:[%s1 + $0x58] sm:$0xf]
    %v105 = vld [vmem:[%s1 + $0x5c] sm:$0xf]
    %v106 = vld [vmem:[%s1 + $0x60] sm:$0xf]
    %v107 = vld [vmem:[%s1 + $0x64] sm:$0xf]
    %v108 = vld [vmem:[%s1 + $0x68] sm:$0xf]
    %v109 = vld [vmem:[%s1 + $0x6c] sm:$0xf]
    %v110 = vld [vmem:[%s1 + $0x70] sm:$0xf]
    %v111 = vld [vmem:[%s1 + $0x74] sm:$0xf]
    %v112 = vld [vmem:[%s1 + $0x78] sm:$0xf]
    %v113 = vld [vmem:[%s1 + $0x7c] sm:$0xf]
    %v114 = vld [vmem:[%s2] sm:$0x1]
    %v116 = vlaneseq
    %v117 = vshrl.u32 %v116, 7
    %v118 = vsub.s32 0, %v117
    %v119 = vrot.slane %v114, %v118
    %v153 = vunpack.c.l.b16 %v82
    %v154 = vunpack.c.l.b16 %v83
    %v155 = vunpack.c.l.b16 %v84
    %v156 = vunpack.c.l.b16 %v85
    %v157 = vunpack.c.l.b16 %v86
    %v158 = vunpack.c.l.b16 %v87
    %v159 = vunpack.c.l.b16 %v88
    %v160 = vunpack.c.l.b16 %v89
    %v161 = vunpack.c.l.b16 %v90
    %v162 = vunpack.c.l.b16 %v91
    %v163 = vunpack.c.l.b16 %v92
    %v164 = vunpack.c.l.b16 %v93
    %v165 = vunpack.c.l.b16 %v94
    %v166 = vunpack.c.l.b16 %v95
    %v167 = vunpack.c.l.b16 %v96
    %v168 = vunpack.c.l.b16 %v97
    %v169 = vunpack.c.l.b16 %v98
    %v170 = vunpack.c.l.b16 %v99
    %v171 = vunpack.c.l.b16 %v100
    %v172 = vunpack.c.l.b16 %v101
    %v173 = vunpack.c.l.b16 %v102
    %v174 = vunpack.c.l.b16 %v103
    %v175 = vunpack.c.l.b16 %v104
    %v176 = vunpack.c.l.b16 %v105
    %v177 = vunpack.c.l.b16 %v106
    %v178 = vunpack.c.l.b16 %v107
    %v179 = vunpack.c.l.b16 %v108
    %v180 = vunpack.c.l.b16 %v109
    %v181 = vunpack.c.l.b16 %v110
    %v182 = vunpack.c.l.b16 %v111
    %v183 = vunpack.c.l.b16 %v112
    %v184 = vunpack.c.l.b16 %v113
    %v185 = vpack.c.b16 %v154, %v153
    %v186 = vpack.c.b16 %v156, %v155
    %v187 = vpack.c.b16 %v158, %v157
    %v188 = vpack.c.b16 %v160, %v159
    %v189 = vpack.c.b16 %v162, %v161
    %v190 = vpack.c.b16 %v164, %v163
    %v191 = vpack.c.b16 %v166, %v165
    %v192 = vpack.c.b16 %v168, %v167
    %v193 = vpack.c.b16 %v170, %v169
    %v194 = vpack.c.b16 %v172, %v171
    %v195 = vpack.c.b16 %v174, %v173
    %v196 = vpack.c.b16 %v176, %v175
    %v197 = vpack.c.b16 %v178, %v177
    %v198 = vpack.c.b16 %v180, %v179
    %v199 = vpack.c.b16 %v182, %v181
    %v200 = vpack.c.b16 %v184, %v183
    %217 = vmatprep.subr.bf16.mxu0 0
    %218 = vmatpush1.bf16.msra.mxu0 %v192
    %219 = vmatprep.subr.bf16.mxu0 0
    %220 = vmatpush1.bf16.msra.mxu0 %v191
    %221 = vmatprep.subr.bf16.mxu0 0
    %222 = vmatpush1.bf16.msra.mxu0 %v190
    %223 = vmatprep.subr.bf16.mxu0 0
    %224 = vmatpush1.bf16.msra.mxu0 %v189
    %225 = vmatprep.subr.bf16.mxu0 0
    %226 = vmatpush1.bf16.msra.mxu0 %v188
    %227 = vmatprep.subr.bf16.mxu0 0
    %228 = vmatpush1.bf16.msra.mxu0 %v187
    %229 = vmatprep.subr.bf16.mxu0 0
    %230 = vmatpush1.bf16.msra.mxu0 %v186
    %231 = vmatprep.subr.bf16.mxu0 0
    %232 = vmatpush1.bf16.msra.mxu0 %v185
    %233 = vmatprep.subr.bf16.mxu0 0
    %234 = vmatpush2.bf16.msra.mxu0 %v200
    %235 = vmatprep.subr.bf16.mxu0 0
    %236 = vmatpush2.bf16.msra.mxu0 %v199
    %237 = vmatprep.subr.bf16.mxu0 0
    %238 = vmatpush2.bf16.msra.mxu0 %v198
    %239 = vmatprep.subr.bf16.mxu0 0
    %240 = vmatpush2.bf16.msra.mxu0 %v197
    %241 = vmatprep.subr.bf16.mxu0 0
    %242 = vmatpush2.bf16.msra.mxu0 %v196
    %243 = vmatprep.subr.bf16.mxu0 0
    %244 = vmatpush2.bf16.msra.mxu0 %v195
    %245 = vmatprep.subr.bf16.mxu0 0
    %246 = vmatpush2.bf16.msra.mxu0 %v194
    %247 = vmatprep.subr.bf16.mxu0 0
    %248 = vmatpush2.bf16.msra.mxu0 %v193
    %249 = vmatprep.mubr.bf16.mxu0 %v81
    %250 = vmatmul.mubr.bf16.gmra.mxu0 %v80
    %v251 = vpop.f32.mrf.mxu0
    %v252 = vadd.f32 %v119, %v251
    %v253 = vpop.f32.mrf.mxu0
    %v254 = vpop.f32.mrf.mxu0
    %v255 = vpop.f32.mrf.mxu0
    %256 = vdwg.mxu0
    %v257 = vtanh.pop %v252
    %v258 = vpack.c.bf16 %v257, %v257
    %v259 = vld [vmem:[%s3] sm:$0xf]
    %v260 = vld [vmem:[%s3 + $0x4] sm:$0xf]
    %v261 = vld [vmem:[%s3 + $0x8] sm:$0xf]
    %v262 = vld [vmem:[%s3 + $0xc] sm:$0xf]
    %v263 = vld [vmem:[%s3 + $0x10] sm:$0xf]
    %v264 = vld [vmem:[%s3 + $0x14] sm:$0xf]
    %v265 = vld [vmem:[%s3 + $0x18] sm:$0xf]
    %v266 = vld [vmem:[%s3 + $0x1c] sm:$0xf]
    %v267 = vld [vmem:[%s3 + $0x20] sm:$0xf]
    %v268 = vld [vmem:[%s3 + $0x24] sm:$0xf]
    %v269 = vld [vmem:[%s3 + $0x28] sm:$0xf]
    %v270 = vld [vmem:[%s3 + $0x2c] sm:$0xf]
    %v271 = vld [vmem:[%s3 + $0x30] sm:$0xf]
    %v272 = vld [vmem:[%s3 + $0x34] sm:$0xf]
    %v273 = vld [vmem:[%s3 + $0x38] sm:$0xf]
    %v274 = vld [vmem:[%s3 + $0x3c] sm:$0xf]
    %v275 = vld [vmem:[%s4] sm:$0x1]
    %v277 = vlaneseq
    %v278 = vshrl.u32 %v277, 7
    %v279 = vsub.s32 0, %v278
    %v280 = vrot.slane %v275, %v279
    %v298 = vunpack.c.l.b16 %v259
    %v299 = vunpack.c.l.b16 %v260
    %v300 = vunpack.c.l.b16 %v261
    %v301 = vunpack.c.l.b16 %v262
    %v302 = vunpack.c.l.b16 %v263
    %v303 = vunpack.c.l.b16 %v264
    %v304 = vunpack.c.l.b16 %v265
    %v305 = vunpack.c.l.b16 %v266
    %v306 = vunpack.c.l.b16 %v267
    %v307 = vunpack.c.l.b16 %v268
    %v308 = vunpack.c.l.b16 %v269
    %v309 = vunpack.c.l.b16 %v270
    %v310 = vunpack.c.l.b16 %v271
    %v311 = vunpack.c.l.b16 %v272
    %v312 = vunpack.c.l.b16 %v273
    %v313 = vunpack.c.l.b16 %v274
    %v314 = vpack.c.b16 %v299, %v298
    %v315 = vpack.c.b16 %v301, %v300
    %v316 = vpack.c.b16 %v303, %v302
    %v317 = vpack.c.b16 %v305, %v304
    %v318 = vpack.c.b16 %v307, %v306
    %v319 = vpack.c.b16 %v309, %v308
    %v320 = vpack.c.b16 %v311, %v310
    %v321 = vpack.c.b16 %v313, %v312
    %330 = vmatprep.subr.bf16.mxu0 0
    %331 = vmatpush1.bf16.msra.mxu0 %v321
    %332 = vmatprep.subr.bf16.mxu0 0
    %333 = vmatpush1.bf16.msra.mxu0 %v320
    %334 = vmatprep.subr.bf16.mxu0 0
    %335 = vmatpush1.bf16.msra.mxu0 %v319
    %336 = vmatprep.subr.bf16.mxu0 0
    %337 = vmatpush1.bf16.msra.mxu0 %v318
    %338 = vmatprep.subr.bf16.mxu0 0
    %339 = vmatpush1.bf16.msra.mxu0 %v317
    %340 = vmatprep.subr.bf16.mxu0 0
    %341 = vmatpush1.bf16.msra.mxu0 %v316
    %342 = vmatprep.subr.bf16.mxu0 0
    %343 = vmatpush1.bf16.msra.mxu0 %v315
    %344 = vmatprep.subr.bf16.mxu0 0
    %345 = vmatpush1.bf16.msra.mxu0 %v314
    %346 = vmatprep.subr.bf16.mxu0 0
    %347 = vmatpush2.bf16.msra.mxu0 0
    %348 = vmatprep.subr.bf16.mxu0 0
    %349 = vmatpush2.bf16.msra.mxu0 0
    %350 = vmatprep.subr.bf16.mxu0 0
    %351 = vmatpush2.bf16.msra.mxu0 0
    %352 = vmatprep.subr.bf16.mxu0 0
    %353 = vmatpush2.bf16.msra.mxu0 0
    %354 = vmatprep.subr.bf16.mxu0 0
    %355 = vmatpush2.bf16.msra.mxu0 0
    %356 = vmatprep.subr.bf16.mxu0 0
    %357 = vmatpush2.bf16.msra.mxu0 0
    %358 = vmatprep.subr.bf16.mxu0 0
    %359 = vmatpush2.bf16.msra.mxu0 0
    %360 = vmatprep.subr.bf16.mxu0 0
    %361 = vmatpush2.bf16.msra.mxu0 0
    %362 = vmatprep.mubr.bf16.mxu0 0
    %363 = vmatmul.mubr.bf16.gmra.mxu0 %v258
    %v364 = vpop.f32.mrf.mxu0
    %v365 = vadd.f32 %v280, %v364
    %v366 = vpop.f32.mrf.mxu0
    %v367 = vpop.f32.mrf.mxu0
    %v368 = vpop.f32.mrf.mxu0
    %369 = vdwg.mxu0
    %v370 = vld [vmem:[%s5] sm:$0xf]
    %v371 = vld [vmem:[%s5 + $0x4] sm:$0xf]
    %v372 = vld [vmem:[%s5 + $0x8] sm:$0xf]
    %v373 = vld [vmem:[%s5 + $0xc] sm:$0xf]
    %v374 = vld [vmem:[%s5 + $0x10] sm:$0xf]
    %v375 = vld [vmem:[%s5 + $0x14] sm:$0xf]
    %v376 = vld [vmem:[%s5 + $0x18] sm:$0xf]
    %v377 = vld [vmem:[%s5 + $0x1c] sm:$0xf]
    %v378 = vld [vmem:[%s5 + $0x20] sm:$0xf]
    %v379 = vld [vmem:[%s5 + $0x24] sm:$0xf]
    %v380 = vld [vmem:[%s5 + $0x28] sm:$0xf]
    %v381 = vld [vmem:[%s5 + $0x2c] sm:$0xf]
    %v382 = vld [vmem:[%s5 + $0x30] sm:$0xf]
    %v383 = vld [vmem:[%s5 + $0x34] sm:$0xf]
    %v384 = vld [vmem:[%s5 + $0x38] sm:$0xf]
    %v385 = vld [vmem:[%s5 + $0x3c] sm:$0xf]
    %v386 = vld [vmem:[%s6] sm:$0x1]
    %v388 = vlaneseq
    %v389 = vshrl.u32 %v388, 7
    %v390 = vsub.s32 0, %v389
    %v391 = vrot.slane %v386, %v390
    %v409 = vunpack.c.l.b16 %v370
    %v410 = vunpack.c.l.b16 %v371
    %v411 = vunpack.c.l.b16 %v372
    %v412 = vunpack.c.l.b16 %v373
    %v413 = vunpack.c.l.b16 %v374
    %v414 = vunpack.c.l.b16 %v375
    %v415 = vunpack.c.l.b16 %v376
    %v416 = vunpack.c.l.b16 %v377
    %v417 = vunpack.c.l.b16 %v378
    %v418 = vunpack.c.l.b16 %v379
    %v419 = vunpack.c.l.b16 %v380
    %v420 = vunpack.c.l.b16 %v381
    %v421 = vunpack.c.l.b16 %v382
    %v422 = vunpack.c.l.b16 %v383
    %v423 = vunpack.c.l.b16 %v384
    %v424 = vunpack.c.l.b16 %v385
    %v425 = vpack.c.b16 %v410, %v409
    %v426 = vpack.c.b16 %v412, %v411
    %v427 = vpack.c.b16 %v414, %v413
    %v428 = vpack.c.b16 %v416, %v415
    %v429 = vpack.c.b16 %v418, %v417
    %v430 = vpack.c.b16 %v420, %v419
    %v431 = vpack.c.b16 %v422, %v421
    %v432 = vpack.c.b16 %v424, %v423
    %441 = vmatprep.subr.bf16.mxu0 0
    %442 = vmatpush1.bf16.msra.mxu0 %v432
    %443 = vmatprep.subr.bf16.mxu0 0
    %444 = vmatpush1.bf16.msra.mxu0 %v431
    %445 = vmatprep.subr.bf16.mxu0 0
    %446 = vmatpush1.bf16.msra.mxu0 %v430
    %447 = vmatprep.subr.bf16.mxu0 0
    %448 = vmatpush1.bf16.msra.mxu0 %v429
    %449 = vmatprep.subr.bf16.mxu0 0
    %450 = vmatpush1.bf16.msra.mxu0 %v428
    %451 = vmatprep.subr.bf16.mxu0 0
    %452 = vmatpush1.bf16.msra.mxu0 %v427
    %453 = vmatprep.subr.bf16.mxu0 0
    %454 = vmatpush1.bf16.msra.mxu0 %v426
    %455 = vmatprep.subr.bf16.mxu0 0
    %456 = vmatpush1.bf16.msra.mxu0 %v425
    %457 = vmatprep.subr.bf16.mxu0 0
    %458 = vmatpush2.bf16.msra.mxu0 0
    %459 = vmatprep.subr.bf16.mxu0 0
    %460 = vmatpush2.bf16.msra.mxu0 0
    %461 = vmatprep.subr.bf16.mxu0 0
    %462 = vmatpush2.bf16.msra.mxu0 0
    %463 = vmatprep.subr.bf16.mxu0 0
    %464 = vmatpush2.bf16.msra.mxu0 0
    %465 = vmatprep.subr.bf16.mxu0 0
    %466 = vmatpush2.bf16.msra.mxu0 0
    %467 = vmatprep.subr.bf16.mxu0 0
    %468 = vmatpush2.bf16.msra.mxu0 0
    %469 = vmatprep.subr.bf16.mxu0 0
    %470 = vmatpush2.bf16.msra.mxu0 0
    %471 = vmatprep.subr.bf16.mxu0 0
    %472 = vmatpush2.bf16.msra.mxu0 0
    %473 = vmatprep.mubr.bf16.mxu0 0
    %474 = vmatmul.mubr.bf16.gmra.mxu0 %v258
    %v475 = vpop.f32.mrf.mxu0
    %v476 = vadd.f32 %v391, %v475
    %v477 = vpop.f32.mrf.mxu0
    %v478 = vpop.f32.mrf.mxu0
    %v479 = vpop.f32.mrf.mxu0
    %480 = vdwg.mxu0
    %v481 = vpack.c.bf16 %v365, %v365
    %v482 = vld [vmem:[%s7] sm:$0xf]
    %v483 = vld [vmem:[%s7 + $0x4] sm:$0xf]
    %v484 = vld [vmem:[%s7 + $0x8] sm:$0xf]
    %v485 = vld [vmem:[%s7 + $0xc] sm:$0xf]
    %v486 = vld [vmem:[%s7 + $0x10] sm:$0xf]
    %v487 = vld [vmem:[%s7 + $0x14] sm:$0xf]
    %v488 = vld [vmem:[%s7 + $0x18] sm:$0xf]
    %v489 = vld [vmem:[%s7 + $0x1c] sm:$0xf]
    %v490 = vld [vmem:[%s8] sm:$0x1]
    %v492 = vlaneseq
    %v493 = vshrl.u32 %v492, 7
    %v494 = vsub.s32 0, %v493
    %v495 = vrot.slane %v490, %v494
    %v505 = vunpack.c.l.b16 %v482
    %v506 = vunpack.c.l.b16 %v483
    %v507 = vunpack.c.l.b16 %v484
    %v508 = vunpack.c.l.b16 %v485
    %v509 = vunpack.c.l.b16 %v486
    %v510 = vunpack.c.l.b16 %v487
    %v511 = vunpack.c.l.b16 %v488
    %v512 = vunpack.c.l.b16 %v489
    %v513 = vpack.c.b16 %v506, %v505
    %v514 = vpack.c.b16 %v508, %v507
    %v515 = vpack.c.b16 %v510, %v509
    %v516 = vpack.c.b16 %v512, %v511
    %vm521 = vcmask 523264
    %v523 = vsel %vm521, %v481, 0
    %525 = vmatprep.subr.bf16.mxu0 0
    %526 = vmatpush1.bf16.msra.mxu0 0
    %527 = vmatprep.subr.bf16.mxu0 0
    %528 = vmatpush1.bf16.msra.mxu0 0
    %529 = vmatprep.subr.bf16.mxu0 0
    %530 = vmatpush1.bf16.msra.mxu0 0
    %531 = vmatprep.subr.bf16.mxu0 0
    %532 = vmatpush1.bf16.msra.mxu0 0
    %533 = vmatprep.subr.bf16.mxu0 0
    %534 = vmatpush1.bf16.msra.mxu0 %v516
    %535 = vmatprep.subr.bf16.mxu0 0
    %536 = vmatpush1.bf16.msra.mxu0 %v515
    %537 = vmatprep.subr.bf16.mxu0 0
    %538 = vmatpush1.bf16.msra.mxu0 %v514
    %539 = vmatprep.subr.bf16.mxu0 0
    %540 = vmatpush1.bf16.msra.mxu0 %v513
    %541 = vmatprep.subr.bf16.mxu0 0
    %542 = vmatpush2.bf16.msra.mxu0 0
    %543 = vmatprep.subr.bf16.mxu0 0
    %544 = vmatpush2.bf16.msra.mxu0 0
    %545 = vmatprep.subr.bf16.mxu0 0
    %546 = vmatpush2.bf16.msra.mxu0 0
    %547 = vmatprep.subr.bf16.mxu0 0
    %548 = vmatpush2.bf16.msra.mxu0 0
    %549 = vmatprep.subr.bf16.mxu0 0
    %550 = vmatpush2.bf16.msra.mxu0 0
    %551 = vmatprep.subr.bf16.mxu0 0
    %552 = vmatpush2.bf16.msra.mxu0 0
    %553 = vmatprep.subr.bf16.mxu0 0
    %554 = vmatpush2.bf16.msra.mxu0 0
    %555 = vmatprep.subr.bf16.mxu0 0
    %556 = vmatpush2.bf16.msra.mxu0 0
    %557 = vmatprep.mubr.bf16.mxu0 0
    %558 = vmatmul.mubr.bf16.gmra.mxu0 %v523
    %v559 = vpop.f32.mrf.mxu0
    %v560 = vadd.f32 %v495, %v559
    %v561 = vpop.f32.mrf.mxu0
    %v562 = vpop.f32.mrf.mxu0
    %v563 = vpop.f32.mrf.mxu0
    %564 = vdwg.mxu0
    %v565 = vtanh.pop %v560
    %v566 = vpack.c.bf16 %v565, %v565
    %v567 = vld [vmem:[#allocation5] sm:$0xff]
    %v568 = vld [vmem:[#allocation5 + $0x8] sm:$0xff]
    %v569 = vld [vmem:[#allocation5 + $0x10] sm:$0xff]
    %v570 = vld [vmem:[#allocation5 + $0x18] sm:$0xff]
    %v571 = vld [vmem:[#allocation5 + $0x20] sm:$0xff]
    %v572 = vld [vmem:[#allocation5 + $0x28] sm:$0xff]
    %v573 = vld [vmem:[#allocation5 + $0x30] sm:$0xff]
    %v574 = vld [vmem:[#allocation5 + $0x38] sm:$0xff]
    %v575 = vld [vmem:[#allocation5 + $0x40] sm:$0xff]
    %v576 = vld [vmem:[#allocation5 + $0x48] sm:$0xff]
    %v577 = vld [vmem:[#allocation5 + $0x50] sm:$0xff]
    %v578 = vld [vmem:[#allocation5 + $0x58] sm:$0xff]
    %v579 = vld [vmem:[#allocation5 + $0x60] sm:$0xff]
    %v580 = vld [vmem:[#allocation5 + $0x68] sm:$0xff]
    %v581 = vld [vmem:[#allocation5 + $0x70] sm:$0xff]
    %v582 = vld [vmem:[#allocation5 + $0x78] sm:$0xff]
    %v583 = vld [vmem:[%s10] sm:$0x3]
    %v585 = vlaneseq
    %v586 = vshrl.u32 %v585, 7
    %v587 = vsub.s32 0, %v586
    %v588 = vrot.slane %v583, %v587
    %v589 = vlaneseq
    %v590 = vshrl.u32 %v589, 7
    %v591 = vsub.s32 1, %v590
    %v592 = vrot.slane %v583, %v591
    %v611 = vunpack.c.l.b16 %v567
    %v612 = vunpack.c.h.b16 %v567
    %v613 = vunpack.c.l.b16 %v568
    %v614 = vunpack.c.h.b16 %v568
    %v615 = vunpack.c.l.b16 %v569
    %v616 = vunpack.c.h.b16 %v569
    %v617 = vunpack.c.l.b16 %v570
    %v618 = vunpack.c.h.b16 %v570
    %v619 = vunpack.c.l.b16 %v571
    %v620 = vunpack.c.h.b16 %v571
    %v621 = vunpack.c.l.b16 %v572
    %v622 = vunpack.c.h.b16 %v572
    %v623 = vunpack.c.l.b16 %v573
    %v624 = vunpack.c.h.b16 %v573
    %v625 = vunpack.c.l.b16 %v574
    %v626 = vunpack.c.h.b16 %v574
    %v627 = vunpack.c.l.b16 %v575
    %v628 = vunpack.c.h.b16 %v575
    %v629 = vunpack.c.l.b16 %v576
    %v630 = vunpack.c.h.b16 %v576
    %v631 = vunpack.c.l.b16 %v577
    %v632 = vunpack.c.h.b16 %v577
    %v633 = vunpack.c.l.b16 %v578
    %v634 = vunpack.c.h.b16 %v578
    %v635 = vunpack.c.l.b16 %v579
    %v636 = vunpack.c.h.b16 %v579
    %v637 = vunpack.c.l.b16 %v580
    %v638 = vunpack.c.h.b16 %v580
    %v639 = vunpack.c.l.b16 %v581
    %v640 = vunpack.c.h.b16 %v581
    %v641 = vunpack.c.l.b16 %v582
    %v642 = vunpack.c.h.b16 %v582
    %v643 = vpack.c.b16 %v613, %v611
    %v644 = vpack.c.b16 %v614, %v612
    %v645 = vpack.c.b16 %v617, %v615
    %v646 = vpack.c.b16 %v618, %v616
    %v647 = vpack.c.b16 %v621, %v619
    %v648 = vpack.c.b16 %v622, %v620
    %v649 = vpack.c.b16 %v625, %v623
    %v650 = vpack.c.b16 %v626, %v624
    %v651 = vpack.c.b16 %v629, %v627
    %v652 = vpack.c.b16 %v630, %v628
    %v653 = vpack.c.b16 %v633, %v631
    %v654 = vpack.c.b16 %v634, %v632
    %v655 = vpack.c.b16 %v637, %v635
    %v656 = vpack.c.b16 %v638, %v636
    %v657 = vpack.c.b16 %v641, %v639
    %v658 = vpack.c.b16 %v642, %v640
    %675 = vmatprep.subr.bf16.mxu0 %v658
    %676 = vmatpush1.bf16.msra.mxu0 %v657
    %677 = vmatprep.subr.bf16.mxu0 %v656
    %678 = vmatpush1.bf16.msra.mxu0 %v655
    %679 = vmatprep.subr.bf16.mxu0 %v654
    %680 = vmatpush1.bf16.msra.mxu0 %v653
    %681 = vmatprep.subr.bf16.mxu0 %v652
    %682 = vmatpush1.bf16.msra.mxu0 %v651
    %683 = vmatprep.subr.bf16.mxu0 %v650
    %684 = vmatpush1.bf16.msra.mxu0 %v649
    %685 = vmatprep.subr.bf16.mxu0 %v648
    %686 = vmatpush1.bf16.msra.mxu0 %v647
    %687 = vmatprep.subr.bf16.mxu0 %v646
    %688 = vmatpush1.bf16.msra.mxu0 %v645
    %689 = vmatprep.subr.bf16.mxu0 %v644
    %690 = vmatpush1.bf16.msra.mxu0 %v643
    %691 = vmatprep.subr.bf16.mxu0 0
    %692 = vmatpush2.bf16.msra.mxu0 0
    %693 = vmatprep.subr.bf16.mxu0 0
    %694 = vmatpush2.bf16.msra.mxu0 0
    %695 = vmatprep.subr.bf16.mxu0 0
    %696 = vmatpush2.bf16.msra.mxu0 0
    %697 = vmatprep.subr.bf16.mxu0 0
    %698 = vmatpush2.bf16.msra.mxu0 0
    %699 = vmatprep.subr.bf16.mxu0 0
    %700 = vmatpush2.bf16.msra.mxu0 0
    %701 = vmatprep.subr.bf16.mxu0 0
    %702 = vmatpush2.bf16.msra.mxu0 0
    %703 = vmatprep.subr.bf16.mxu0 0
    %704 = vmatpush2.bf16.msra.mxu0 0
    %705 = vmatprep.subr.bf16.mxu0 0
    %706 = vmatpush2.bf16.msra.mxu0 0
    %707 = vmatprep.mubr.bf16.mxu0 0
    %708 = vmatmul.mubr.bf16.gmra.mxu0 %v566
    %v709 = vpop.f32.mrf.mxu0
    %v710 = vadd.f32 %v588, %v709
    %v711 = vpop.f32.mrf.mxu0
    %v712 = vadd.f32 %v592, %v711
    %v713 = vpop.f32.mrf.mxu0
    %v714 = vpop.f32.mrf.mxu0
    %715 = vdwg.mxu0
    %716 = vst [vmem:[#allocation7] sm:$0xff] %v710
    %717 = vst [vmem:[#allocation7 + $0x8] sm:$0xff] %v712
    %s718 = smul.u32 0, 8
    %v719 = vlaneseq
    %v720 = vshrl.u32 %v719, 7
    %v721 = vstv %s718
    %v722 = vadd.s32 %v721, %v720
    %vm723 = vcmp.lt.s32.totalorder %v722, 8
    %v724 = vsel %vm723, 1, 0
    %v725 = vcvt.s32.f32 %v724
    %v726 = vadd.f32 %v476, 1.0
    %v727 = vmul.f32 %v365, %v365
    %v728 = vsub.f32 %v726, %v727
    %v729 = vmul.f32 %v476, 1.442695
    %v730 = vpow.pop %v729
    %v731 = vsub.f32 %v728, %v730
    %v732 = vsel %vm521, %v731, 0.0
    %733 = vadd.xlane.f32.xlu0 %v732
    %v734 = vpop.xlane.xlu0 %733
    %v735 = vmul.f32 %v734, %v725
    %vm736 = vcmask 7168
    %v737 = vsel %vm736, %v735, 0.0
    %738 = vadd.xlane.f32.xlu0 %v737
    %v739 = vpop.xlane.xlu0 %738
    %v740 = vrot.slane %v739, 4
    %v741 = vadd.f32 %v739, %v740
    %v742 = vrot.slane %v741, 2
    %v743 = vadd.f32 %v741, %v742
    %v744 = vrot.slane %v743, 1
    %v745 = vadd.f32 %v743, %v744
    %s746 = vtos %v745
    %v747 = vmax.f32 %v710, %v712
    %748 = vmax.xlane.f32.xlu0 %v747
    %v749 = vpop.xlane.xlu0 %748
    %v750 = vsub.f32 %v710, %v749
    %v751 = vsub.f32 %v712, %v749
    %v752 = vmul.f32 %v750, 1.442695
    %v753 = vpow.pop %v752
    %v754 = vmul.f32 %v751, 1.442695
    %v755 = vpow.pop %v754
    %v756 = vadd.f32 %v753, %v755
    %757 = vadd.xlane.f32.xlu0 %v756
    %v758 = vpop.xlane.xlu0 %757
    %v759 = vlog2.pop %v758
    %v760 = vmul.f32 %v759, 0.6931472
    %v761 = vsub.f32 %v750, %v760
    %v762 = vsub.f32 %v751, %v760
    %v763 = vmul.f32 %v761, %v69
    %v764 = vmul.f32 %v762, %v70
    %v765 = vadd.f32 %v763, %v764
    %766 = vadd.xlane.f32.xlu0 %v765
    %v767 = vpop.xlane.xlu0 %766
    %v768 = vmul.f32 %v767, %v725
    %v769 = vsel %vm736, %v768, 0.0
    %770 = vadd.xlane.f32.xlu0 %v769
    %v771 = vpop.xlane.xlu0 %770
    %v772 = vrot.slane %v771, 4
    %v773 = vadd.f32 %v771, %v772
    %v774 = vrot.slane %v773, 2
    %v775 = vadd.f32 %v773, %v774
    %v776 = vrot.slane %v775, 1
    %v777 = vadd.f32 %v775, %v776
    %s778 = vtos %v777
    %vm779 = vcmp.eq.s32.totalorder %v720, 0
    %vm780 = vcmp.eq.s32.totalorder %v720, 1
    %v781 = vstv %s778
    %v782 = vsel %vm780, %v781, 0.0
    %v783 = vstv %s746
    %v784 = vsel %vm779, %v783, %v782
    %785 = vst [vmem:[#allocation8] sm:$0xff] %v784
    // Predicated region
    $region54: #{tpu_custom_call.1} parent=1 // pred_check
      _
    $region55: #{tpu_custom_call.1} parent=1 // pred_check_branch
      %787 = sbr.rel (0) target = $region57
    $region56: #{tpu_custom_call.1} parent=1 // pred_region
      %s789 = ssub.s32 256, 256
      %790 = vsyncadd [#allocation4], %s789
      %s792 = sshll.u32 [#allocation7], 4
      %s793 = int_to_ptr.vmem [resolvable:$true] %s792
      %795 = dma.vmem_to_hbm [thread:$0]  %s793, 256, %s11, [#allocation4]
    $region57: #{tpu_custom_call.1} parent=1 // pred_fallthru
      _
    // Predicated region
    $region58: #{tpu_custom_call.1} parent=1 // pred_check
      _
    $region59: #{tpu_custom_call.1} parent=1 // pred_check_branch
      %797 = sbr.rel (0) target = $region61
    $region60: #{tpu_custom_call.1} parent=1 // pred_region
      %s799 = ssub.s32 128, 128
      %800 = vsyncadd [#allocation9], %s799
      %s802 = sshll.u32 [#allocation8], 4
      %s803 = int_to_ptr.vmem [resolvable:$true] %s802
      %805 = dma.vmem_to_hbm [thread:$0]  %s803, 128, %s12, [#allocation9]
    $region61: #{tpu_custom_call.1} parent=1 // pred_fallthru
      _
    // Predicated region
    $region62: #{tpu_custom_call.1} parent=1 // pred_check
      _
    $region63: #{tpu_custom_call.1} parent=1 // pred_check_branch
      %807 = sbr.rel (0) target = $region65
    $region64: #{tpu_custom_call.1} parent=1 // pred_region
      %808 = dma.done [#allocation4], 256
    $region65: #{tpu_custom_call.1} parent=1 // pred_fallthru
      _
    // Predicated region
    $region66: #{tpu_custom_call.1} parent=1 // pred_check
      _
    $region67: #{tpu_custom_call.1} parent=1 // pred_check_branch
      %810 = sbr.rel (0) target = $region69
    $region68: #{tpu_custom_call.1} parent=1 // pred_region
      %811 = dma.done [#allocation9], 128
    $region69: #{tpu_custom_call.1} parent=1 // pred_fallthru
      _
    %812 = vsyncpa [#allocation3], 1
    %813 = vsyncpa [#allocation6], 1
    %814 = vsyncpa [#allocation4], 1
    %815 = vsyncpa [#allocation9], 1

</llo_original>
